<compile_context>
chip_gen: v7x
topology: tpu7x:2x2x1
jax: 0.10.0
libtpu: 0.0.40
codegen_flags: <defaults>
</compile_context>

<pallas_src>
import functools

import jax
import jax.numpy as jnp
from jax.experimental import pallas as pl
from jax.experimental.pallas import tpu as pltpu


_LANE = 128
_MAX_BLOCK_COLS = 2048          # keep per-row f32 working set modest; grow rows instead
_MAX_BLOCK_ROWS = 2048
_MASK_VALUE = -1e30             # finite "-inf": exp underflows to 0, 0*mask stays finite


def _round_up(x, m):
    return (x + m - 1) // m * m


def _vmem_limit_bytes():
    """Generation-aware scoped-VMEM limit (3/4 of physical, conservative fallback)."""
    phys = 64 * 1024 * 1024                      # v7x per-TensorCore VMEM (smallest)
    try:
        info = pltpu.get_tpu_info()
        cap = getattr(info, "vmem_capacity_bytes", None)
        if cap:
            phys = int(cap)
    except Exception:
        pass
    return min(phys * 3 // 4, 100 * 1024 * 1024)  # 96 MiB on v5e/v6e, 48 MiB on v7x


def _num_tensorcores():
    """Best-effort TensorCores-per-chip query; default 2 (harmless on 1-TC chips)."""
    try:
        info = pltpu.get_tpu_info()
        for attr in ("num_cores", "tensor_core_count", "core_count", "num_tensorcores"):
            v = getattr(info, attr, None)
            if v:
                return int(v)
    except Exception:
        pass
    try:
        v = getattr(jax.devices()[0], "num_cores", None)
        if v:
            return int(v)
    except Exception:
        pass
    return 2


def _select_tiles(n_rows, n_cols, itemsize, max_block_cols, vmem_limit, num_cores):
    """Pick (block_rows, block_cols) under the VMEM budget.

    Budget per row of a tile:
      inputs : 2 arrays x 2 pipeline buffers x block_cols x itemsize
      f32 working set materialized in-kernel (upcast/scaled logits, exp tile,
      f32 labels, labels*logits): ~4 x block_cols x 4 bytes
    """
    max_block_cols = max(_LANE, (int(max_block_cols) // _LANE) * _LANE)
    block_cols = min(_round_up(n_cols, _LANE), max_block_cols)

    row_align = max(8, 32 // int(itemsize))       # sublane packing: 8 f32 / 16 bf16 / 32 i8
    bytes_per_row = 2 * 2 * block_cols * int(itemsize) + 4 * block_cols * 4
    budget = int(vmem_limit * 0.85)
    max_rows = max(row_align, (budget // bytes_per_row) // row_align * row_align)

    # Guarantee >= 2 row blocks (when rows allow) so v7x can shard the parallel axis
    # across both TensorCores.
    want_blocks = num_cores if (num_cores > 1 and n_rows >= 2 * row_align) else 1
    target_rows = _round_up(pl.cdiv(n_rows, want_blocks), row_align)

    block_rows = min(target_rows, max_rows, _MAX_BLOCK_ROWS)
    block_rows = max(row_align, (block_rows // row_align) * row_align)
    return block_rows, block_cols


def _ce_fwd_kernel(logits_ref, labels_ref, loss_ref, lse_ref,
                   m_sc, s_sc, dot_sc, lsum_sc,
                   *, logit_scale, lse_square_scale, n_cols, block_cols):
    col = pl.program_id(1)
    n_col_blocks = pl.num_programs(1)

    @pl.when(col == 0)
    def _():
        m_sc[...] = jnp.full_like(m_sc, -jnp.inf)
        s_sc[...] = jnp.zeros_like(s_sc)
        dot_sc[...] = jnp.zeros_like(dot_sc)
        lsum_sc[...] = jnp.zeros_like(lsum_sc)

    logits_raw = logits_ref[...].astype(jnp.float32)
    if logit_scale != 1.0:                        # static python float -> elided if 1.0
        logits_raw = logits_raw * logit_scale
    labels_raw = labels_ref[...].astype(jnp.float32)

    def accumulate(logits, labels):
        # Online (flash-style) logsumexp over column tiles.
        tile_max = jnp.max(logits, axis=-1, keepdims=True)               # (TR, 1)
        m_new = jnp.maximum(m_sc[...], tile_max)
        alpha = jnp.exp(m_sc[...] - m_new)
        s_sc[...] = alpha * s_sc[...] + jnp.sum(jnp.exp(logits - m_new),
                                                axis=-1, keepdims=True)
        dot_sc[...] = dot_sc[...] + jnp.sum(labels * logits, axis=-1, keepdims=True)
        lsum_sc[...] = lsum_sc[...] + jnp.sum(labels, axis=-1, keepdims=True)
        m_sc[...] = m_new

    remainder = n_cols % block_cols               # static python int
    if remainder != 0:
        # Ragged tail: mask only in the last column block so full tiles pay nothing.
        last = n_col_blocks - 1

        @pl.when(col != last)
        def _():
            accumulate(logits_raw, labels_raw)

        @pl.when(col == last)
        def _():
            lane = jax.lax.broadcasted_iota(jnp.int32, logits_raw.shape, 1)
            valid = lane < remainder
            accumulate(jnp.where(valid, logits_raw, _MASK_VALUE),
                       jnp.where(valid, labels_raw, 0.0))
    else:
        accumulate(logits_raw, labels_raw)

    @pl.when(col == n_col_blocks - 1)
    def _():
        lse = jnp.log(s_sc[...]) + m_sc[...]                              # (TR, 1)
        # loss = -sum(labels*(logits - lse)) + z == -dot + lse*sum(labels) + z
        loss = -dot_sc[...] + lse * lsum_sc[...]
        if lse_square_scale != 0.0:
            loss = loss + lse_square_scale * (lse * lse)
        loss_ref[...] = loss
        lse_ref[...] = lse


def cross_entropy_loss_pallas(logits, labels, *, logit_scale=1.0,
                              lse_square_scale=0.0,
                              max_block_cols=_MAX_BLOCK_COLS):
    """Returns (losses, z_losses, lse), each of shape (n_rows,) in float32."""
    assert logits.ndim == 2 and labels.shape == logits.shape
    n_rows, n_cols = logits.shape
    itemsize = jnp.dtype(logits.dtype).itemsize

    vmem_limit = _vmem_limit_bytes()
    num_cores = _num_tensorcores()
    block_rows, block_cols = _select_tiles(
        n_rows, n_cols, itemsize, max_block_cols, vmem_limit, num_cores)

    n_row_blocks = pl.cdiv(n_rows, block_rows)
    n_col_blocks = pl.cdiv(n_cols, block_cols)
    out_rows = n_row_blocks * block_rows          # outputs allocated block-aligned (tiny)

    kernel = functools.partial(_ce_fwd_kernel,
                               logit_scale=float(logit_scale),
                               lse_square_scale=float(lse_square_scale),
                               n_cols=int(n_cols),
                               block_cols=int(block_cols))

    in_spec = pl.BlockSpec((block_rows, block_cols), lambda i, j: (i, j))
    out_spec = pl.BlockSpec((block_rows, 1), lambda i, j: (i, 0))

    loss, lse = pl.pallas_call(
        kernel,
        grid=(n_row_blocks, n_col_blocks),
        in_specs=[in_spec, in_spec],
        out_specs=[out_spec, out_spec],
        out_shape=[
            jax.ShapeDtypeStruct((out_rows, 1), jnp.float32),
            jax.ShapeDtypeStruct((out_rows, 1), jnp.float32),
        ],
        scratch_shapes=[
            pltpu.VMEM((block_rows, 1), jnp.float32),   # running max
            pltpu.VMEM((block_rows, 1), jnp.float32),   # running sum(exp)
            pltpu.VMEM((block_rows, 1), jnp.float32),   # running sum(labels*logits)
            pltpu.VMEM((block_rows, 1), jnp.float32),   # running sum(labels)
        ],
        compiler_params=pltpu.CompilerParams(
            dimension_semantics=("parallel", "arbitrary"),
            vmem_limit_bytes=vmem_limit),
    )(logits, labels)

    loss = loss[:n_rows, 0]
    lse = lse[:n_rows, 0]
    z_loss = float(lse_square_scale) * lse * lse
    return loss, z_loss, lse


class FusedSoftCrossEntropyLoss:
    """JAX/Pallas port of mmfreelm FusedSoftCrossEntropyLoss (forward pass)."""

    def __init__(self, reduction="mean", logit_scale=1.0, lse_square_scale=0.0,
                 inplace_backward=False, return_z_loss=False):
        self.reduction = reduction
        self.logit_scale = logit_scale
        self.lse_square_scale = lse_square_scale
        self.inplace_backward = inplace_backward  # forward-only: no-op
        self.return_z_loss = return_z_loss

    def __call__(self, input, target):
        loss, z_loss, _ = cross_entropy_loss_pallas(
            input, target,
            logit_scale=self.logit_scale,
            lse_square_scale=self.lse_square_scale)
        if self.reduction == "mean":
            loss = jnp.mean(loss)
            z_loss = jnp.mean(z_loss)
        elif self.reduction == "sum":
            loss = jnp.sum(loss)
            z_loss = jnp.sum(z_loss)
        if self.return_z_loss:
            return loss, z_loss
        return loss


def _reference(logits, labels, logit_scale, lse_square_scale):
    lg = logits.astype(jnp.float32) * logit_scale
    lb = labels.astype(jnp.float32)
    lse = jax.scipy.special.logsumexp(lg, axis=-1)
    z = lse_square_scale * lse * lse
    loss = -jnp.sum(lb * (lg - lse[:, None]), axis=-1) + z
    return loss, z


if __name__ == "__main__":
    key = jax.random.PRNGKey(0)
    logit_scale = 1.25
    lse_square_scale = 1e-4

    # ---- Case 1: small f32, aligned single tile, module API ------------------
    n_rows, n_cols = 16, 128
    k1, k2, k3, k4 = jax.random.split(key, 4)
    logits = jax.random.normal(k1, (n_rows, n_cols), dtype=jnp.float32)
    labels = jax.nn.softmax(jax.random.normal(k2, (n_rows, n_cols),
                                              dtype=jnp.float32), axis=-1)

    module = FusedSoftCrossEntropyLoss(reduction="mean",
                                       logit_scale=logit_scale,
                                       lse_square_scale=lse_square_scale,
                                       return_z_loss=True)
    loss, z_loss = jax.block_until_ready(module(logits, labels))
    ref_loss, ref_z = _reference(logits, labels, logit_scale, lse_square_scale)
    assert jnp.allclose(loss, jnp.mean(ref_loss), rtol=1e-5, atol=1e-5)
    assert jnp.allclose(z_loss, jnp.mean(ref_z), rtol=1e-5, atol=1e-5)

    # ---- Case 2: f32, ragged rows + ragged cols, forced 2 column blocks ------
    n_rows, n_cols = 21, 200
    logits2 = jax.random.normal(k3, (n_rows, n_cols), dtype=jnp.float32)
    labels2 = jax.nn.softmax(jax.random.normal(k4, (n_rows, n_cols),
                                               dtype=jnp.float32), axis=-1)
    l2, z2, _ = cross_entropy_loss_pallas(
        logits2, labels2, logit_scale=logit_scale,
        lse_square_scale=lse_square_scale, max_block_cols=128)  # 2 col blocks + tail mask
    l2, z2 = jax.block_until_ready((l2, z2))
    r2, rz2 = _reference(logits2, labels2, logit_scale, lse_square_scale)
    assert jnp.allclose(l2, r2, rtol=1e-4, atol=1e-4)
    assert jnp.allclose(z2, rz2, rtol=1e-4, atol=1e-4)

    # ---- Case 2b: same ragged shape through the default tile picker ----------
    l2b, z2b, _ = cross_entropy_loss_pallas(
        logits2, labels2, logit_scale=logit_scale, lse_square_scale=lse_square_scale)
    l2b = jax.block_until_ready(l2b)
    assert jnp.allclose(l2b, r2, rtol=1e-4, atol=1e-4)

    # ---- Case 3: bf16 inputs (half the HBM traffic), same f32 math in-kernel --
    logits3 = logits2.astype(jnp.bfloat16)
    labels3 = labels2.astype(jnp.bfloat16)
    l3, z3, _ = cross_entropy_loss_pallas(
        logits3, labels3, logit_scale=logit_scale,
        lse_square_scale=lse_square_scale, max_block_cols=128)
    l3 = jax.block_until_ready(l3)
    r3, _ = _reference(logits3, labels3, logit_scale, lse_square_scale)
    assert jnp.allclose(l3, r3, rtol=1e-4, atol=1e-4)

    print("KERNEL_OK")
</pallas_src>

<mosaic_0001>
module attributes {stable_mosaic.version = 11 : i64} {
  func.func @_ce_fwd_kernel(%arg0: i32, %arg1: i32, %arg2: memref<8x128xf32, #tpu.memory_space<vmem>>, %arg3: memref<8x128xf32, #tpu.memory_space<vmem>>, %arg4: memref<8x1xf32, #tpu.memory_space<vmem>>, %arg5: memref<8x1xf32, #tpu.memory_space<vmem>>, %arg6: memref<8x1xf32, #tpu.memory_space<vmem>>, %arg7: memref<8x1xf32, #tpu.memory_space<vmem>>, %arg8: memref<8x1xf32, #tpu.memory_space<vmem>>, %arg9: memref<8x1xf32, #tpu.memory_space<vmem>>) attributes {dimension_semantics = [#tpu.dimension_semantics<parallel>, #tpu.dimension_semantics<arbitrary>], iteration_bounds = array<i64: 2, 1>, scalar_prefetch = 0 : i64, scratch_operands = 4 : i64, tpu.core_type = #tpu.core_type<tc>, window_params = [{transform_indices = @transform_0, window_bounds = array<i64: 8, 128>}, {transform_indices = @transform_1, window_bounds = array<i64: 8, 128>}, {transform_indices = @transform_2, window_bounds = array<i64: 8, 1>}, {transform_indices = @transform_3, window_bounds = array<i64: 8, 1>}]} {
    %c0_i32 = arith.constant 0 : i32
    %0 = arith.cmpi eq, %arg1, %c0_i32 : i32
    %1 = arith.extui %0 : i1 to i32
    %c0_i32_0 = arith.constant 0 : i32
    %2 = arith.cmpi ne, %1, %c0_i32_0 : i32
    scf.if %2 {
      %cst_28 = arith.constant 0xFF800000 : f32
      %38 = vector.broadcast %cst_28 : f32 to vector<8x1xf32>
      %c0_29 = arith.constant 0 : index
      %c0_30 = arith.constant 0 : index
      %39 = vector.load %arg6[%c0_29, %c0_30] : memref<8x1xf32, #tpu.memory_space<vmem>>, vector<8x1xf32>
      tpu.vector_store %arg6[%c0_29, %c0_30], %38 {strides = array<i32>} : memref<8x1xf32, #tpu.memory_space<vmem>>, vector<8x1xf32>,
      %cst_31 = arith.constant 0.000000e+00 : f32
      %40 = vector.broadcast %cst_31 : f32 to vector<8x1xf32>
      %c0_32 = arith.constant 0 : index
      %c0_33 = arith.constant 0 : index
      %41 = vector.load %arg7[%c0_32, %c0_33] : memref<8x1xf32, #tpu.memory_space<vmem>>, vector<8x1xf32>
      tpu.vector_store %arg7[%c0_32, %c0_33], %40 {strides = array<i32>} : memref<8x1xf32, #tpu.memory_space<vmem>>, vector<8x1xf32>,
      %cst_34 = arith.constant 0.000000e+00 : f32
      %42 = vector.broadcast %cst_34 : f32 to vector<8x1xf32>
      %c0_35 = arith.constant 0 : index
      %c0_36 = arith.constant 0 : index
      %43 = vector.load %arg8[%c0_35, %c0_36] : memref<8x1xf32, #tpu.memory_space<vmem>>, vector<8x1xf32>
      tpu.vector_store %arg8[%c0_35, %c0_36], %42 {strides = array<i32>} : memref<8x1xf32, #tpu.memory_space<vmem>>, vector<8x1xf32>,
      %cst_37 = arith.constant 0.000000e+00 : f32
      %44 = vector.broadcast %cst_37 : f32 to vector<8x1xf32>
      %c0_38 = arith.constant 0 : index
      %c0_39 = arith.constant 0 : index
      %45 = vector.load %arg9[%c0_38, %c0_39] : memref<8x1xf32, #tpu.memory_space<vmem>>, vector<8x1xf32>
      tpu.vector_store %arg9[%c0_38, %c0_39], %44 {strides = array<i32>} : memref<8x1xf32, #tpu.memory_space<vmem>>, vector<8x1xf32>,
    } else {
    }
    %c0 = arith.constant 0 : index
    %c0_1 = arith.constant 0 : index
    %3 = vector.load %arg2[%c0, %c0_1] : memref<8x128xf32, #tpu.memory_space<vmem>>, vector<8x128xf32>
    %cst = arith.constant 1.250000e+00 : f32
    %4 = vector.broadcast %cst : f32 to vector<8x128xf32>
    %5 = arith.mulf %3, %4 : vector<8x128xf32>
    %c0_2 = arith.constant 0 : index
    %c0_3 = arith.constant 0 : index
    %6 = vector.load %arg3[%c0_2, %c0_3] : memref<8x128xf32, #tpu.memory_space<vmem>>, vector<8x128xf32>
    %cst_4 = arith.constant dense<0xFF800000> : vector<8xf32>
    %7 = vector.multi_reduction <maximumf>, %5, %cst_4 [1] : vector<8x128xf32> to vector<8xf32>
    %8 = vector.shape_cast %7 : vector<8xf32> to vector<8x1xf32>
    %c0_5 = arith.constant 0 : index
    %c0_6 = arith.constant 0 : index
    %9 = vector.load %arg6[%c0_5, %c0_6] : memref<8x1xf32, #tpu.memory_space<vmem>>, vector<8x1xf32>
    %10 = arith.maximumf %9, %8 : vector<8x1xf32>
    %c0_7 = arith.constant 0 : index
    %c0_8 = arith.constant 0 : index
    %11 = vector.load %arg6[%c0_7, %c0_8] : memref<8x1xf32, #tpu.memory_space<vmem>>, vector<8x1xf32>
    %12 = arith.subf %11, %10 : vector<8x1xf32>
    %13 = math.exp %12 : vector<8x1xf32>
    %c0_9 = arith.constant 0 : index
    %c0_10 = arith.constant 0 : index
    %14 = vector.load %arg7[%c0_9, %c0_10] : memref<8x1xf32, #tpu.memory_space<vmem>>, vector<8x1xf32>
    %15 = arith.mulf %13, %14 : vector<8x1xf32>
    %16 = vector.broadcast %10 : vector<8x1xf32> to vector<8x128xf32>
    %17 = arith.subf %5, %16 : vector<8x128xf32>
    %18 = math.exp %17 : vector<8x128xf32>
    %cst_11 = arith.constant dense<0.000000e+00> : vector<8xf32>
    %19 = vector.multi_reduction <add>, %18, %cst_11 [1] : vector<8x128xf32> to vector<8xf32>
    %20 = vector.shape_cast %19 : vector<8xf32> to vector<8x1xf32>
    %21 = arith.addf %15, %20 : vector<8x1xf32>
    %c0_12 = arith.constant 0 : index
    %c0_13 = arith.constant 0 : index
    %22 = vector.load %arg7[%c0_12, %c0_13] : memref<8x1xf32, #tpu.memory_space<vmem>>, vector<8x1xf32>
    tpu.vector_store %arg7[%c0_12, %c0_13], %21 {strides = array<i32>} : memref<8x1xf32, #tpu.memory_space<vmem>>, vector<8x1xf32>,
    %c0_14 = arith.constant 0 : index
    %c0_15 = arith.constant 0 : index
    %23 = vector.load %arg8[%c0_14, %c0_15] : memref<8x1xf32, #tpu.memory_space<vmem>>, vector<8x1xf32>
    %24 = arith.mulf %6, %5 : vector<8x128xf32>
    %cst_16 = arith.constant dense<0.000000e+00> : vector<8xf32>
    %25 = vector.multi_reduction <add>, %24, %cst_16 [1] : vector<8x128xf32> to vector<8xf32>
    %26 = vector.shape_cast %25 : vector<8xf32> to vector<8x1xf32>
    %27 = arith.addf %23, %26 : vector<8x1xf32>
    %c0_17 = arith.constant 0 : index
    %c0_18 = arith.constant 0 : index
    %28 = vector.load %arg8[%c0_17, %c0_18] : memref<8x1xf32, #tpu.memory_space<vmem>>, vector<8x1xf32>
    tpu.vector_store %arg8[%c0_17, %c0_18], %27 {strides = array<i32>} : memref<8x1xf32, #tpu.memory_space<vmem>>, vector<8x1xf32>,
    %c0_19 = arith.constant 0 : index
    %c0_20 = arith.constant 0 : index
    %29 = vector.load %arg9[%c0_19, %c0_20] : memref<8x1xf32, #tpu.memory_space<vmem>>, vector<8x1xf32>
    %cst_21 = arith.constant dense<0.000000e+00> : vector<8xf32>
    %30 = vector.multi_reduction <add>, %6, %cst_21 [1] : vector<8x128xf32> to vector<8xf32>
    %31 = vector.shape_cast %30 : vector<8xf32> to vector<8x1xf32>
    %32 = arith.addf %29, %31 : vector<8x1xf32>
    %c0_22 = arith.constant 0 : index
    %c0_23 = arith.constant 0 : index
    %33 = vector.load %arg9[%c0_22, %c0_23] : memref<8x1xf32, #tpu.memory_space<vmem>>, vector<8x1xf32>
    tpu.vector_store %arg9[%c0_22, %c0_23], %32 {strides = array<i32>} : memref<8x1xf32, #tpu.memory_space<vmem>>, vector<8x1xf32>,
    %c0_24 = arith.constant 0 : index
    %c0_25 = arith.constant 0 : index
    %34 = vector.load %arg6[%c0_24, %c0_25] : memref<8x1xf32, #tpu.memory_space<vmem>>, vector<8x1xf32>
    tpu.vector_store %arg6[%c0_24, %c0_25], %10 {strides = array<i32>} : memref<8x1xf32, #tpu.memory_space<vmem>>, vector<8x1xf32>,
    %c0_i32_26 = arith.constant 0 : i32
    %35 = arith.cmpi eq, %arg1, %c0_i32_26 : i32
    %36 = arith.extui %35 : i1 to i32
    %c0_i32_27 = arith.constant 0 : i32
    %37 = arith.cmpi ne, %36, %c0_i32_27 : i32
    scf.if %37 {
      %c0_28 = arith.constant 0 : index
      %c0_29 = arith.constant 0 : index
      %38 = vector.load %arg7[%c0_28, %c0_29] : memref<8x1xf32, #tpu.memory_space<vmem>>, vector<8x1xf32>
      %39 = math.log %38 : vector<8x1xf32>
      %c0_30 = arith.constant 0 : index
      %c0_31 = arith.constant 0 : index
      %40 = vector.load %arg6[%c0_30, %c0_31] : memref<8x1xf32, #tpu.memory_space<vmem>>, vector<8x1xf32>
      %41 = arith.addf %39, %40 : vector<8x1xf32>
      %c0_32 = arith.constant 0 : index
      %c0_33 = arith.constant 0 : index
      %42 = vector.load %arg8[%c0_32, %c0_33] : memref<8x1xf32, #tpu.memory_space<vmem>>, vector<8x1xf32>
      %cst_34 = arith.constant 0.000000e+00 : f32
      %43 = vector.broadcast %cst_34 : f32 to vector<8x1xf32>
      %44 = arith.subf %43, %42 : vector<8x1xf32>
      %c0_35 = arith.constant 0 : index
      %c0_36 = arith.constant 0 : index
      %45 = vector.load %arg9[%c0_35, %c0_36] : memref<8x1xf32, #tpu.memory_space<vmem>>, vector<8x1xf32>
      %46 = arith.mulf %41, %45 : vector<8x1xf32>
      %47 = arith.addf %44, %46 : vector<8x1xf32>
      %48 = arith.mulf %41, %41 : vector<8x1xf32>
      %cst_37 = arith.constant 9.99999974E-5 : f32
      %49 = vector.broadcast %cst_37 : f32 to vector<8x1xf32>
      %50 = arith.mulf %49, %48 : vector<8x1xf32>
      %51 = arith.addf %47, %50 : vector<8x1xf32>
      %c0_38 = arith.constant 0 : index
      %c0_39 = arith.constant 0 : index
      %52 = vector.load %arg4[%c0_38, %c0_39] : memref<8x1xf32, #tpu.memory_space<vmem>>, vector<8x1xf32>
      tpu.vector_store %arg4[%c0_38, %c0_39], %51 {strides = array<i32>} : memref<8x1xf32, #tpu.memory_space<vmem>>, vector<8x1xf32>,
      %c0_40 = arith.constant 0 : index
      %c0_41 = arith.constant 0 : index
      %53 = vector.load %arg5[%c0_40, %c0_41] : memref<8x1xf32, #tpu.memory_space<vmem>>, vector<8x1xf32>
      tpu.vector_store %arg5[%c0_40, %c0_41], %41 {strides = array<i32>} : memref<8x1xf32, #tpu.memory_space<vmem>>, vector<8x1xf32>,
    } else {
    }
    return
  }
  func.func @transform_0(%arg0: i32, %arg1: i32) -> (i32, i32) {
    %c0_i32 = arith.constant 0 : i32
    return %arg0, %arg1 : i32, i32
  }
  func.func @transform_1(%arg0: i32, %arg1: i32) -> (i32, i32) {
    %c0_i32 = arith.constant 0 : i32
    return %arg0, %arg1 : i32, i32
  }
  func.func @transform_2(%arg0: i32, %arg1: i32) -> (i32, i32) {
    %c0_i32 = arith.constant 0 : i32
    %c0_i32_0 = arith.constant 0 : i32
    return %arg0, %c0_i32 : i32, i32
  }
  func.func @transform_3(%arg0: i32, %arg1: i32) -> (i32, i32) {
    %c0_i32 = arith.constant 0 : i32
    %c0_i32_0 = arith.constant 0 : i32
    return %arg0, %c0_i32 : i32, i32
  }
}

</mosaic_0001>

<llo_original>
// kernel: tpu_custom_call.1
$region0: #{tpu_custom_call.1}
  #allocation0 [shape = 'u32[]', space=smem, size = 0x4, offset = 0x4, fixed_abs, tag = 'smem constant byte address 0x4 - core index']
  #allocation1 [shape = 'u32[144,128]{1,0:T(1,128)}', space=vmem, size = 0x12000, scoped, tag = 'internal scratch']
  #allocation2 [shape = 'f32[8,1]{1,0:T(8,128)}', space=vmem, size = 0x1000, scoped, tag = 'scratch operand']
  #allocation3 [shape = 'f32[8,1]{1,0:T(8,128)}', space=vmem, size = 0x1000, scoped, tag = 'scratch operand']
  #allocation4 [shape = 'f32[8,1]{1,0:T(8,128)}', space=vmem, size = 0x1000, scoped, tag = 'scratch operand']
  #allocation5 [shape = 'f32[8,1]{1,0:T(8,128)}', space=vmem, size = 0x1000, scoped, tag = 'scratch operand']
  %s0 = inlined_call_operand.hbm [shape: f32[16,128], index: 0, kind: input, shape index: {}]
  %s1 = inlined_call_operand.hbm [shape: f32[16,128], index: 1, kind: input, shape index: {}]
  %s2 = inlined_call_operand.vmem [shape: f32[16,1], index: 2, kind: output, shape index: {0}]
  %s3 = inlined_call_operand.vmem [shape: f32[16,1], index: 3, kind: output, shape index: {1}]
  %4 = xla_tuple %s2, %s3
  %s5 = sld [smem:[#allocation0]]
  $region65: #{tpu_custom_call.1} parent=0
    _
  %s7 = ssub.s32 1, %s5
  %s8 = scalar_select 0, %s7, %s5
  $region1: #{tpu_custom_call.1} parent=0
    #allocation6 [shape = 'u8[8192]{0}', space=vmem, size = 0x2000, scoped, tag = 'input window, operand 0']
    #allocation7 [shape = 's32[2]{0}', space=sflag, size = 0x8, scoped, tag = 'scoped memory for tpu_custom_call.1']
    #allocation8 [shape = 'u8[8192]{0}', space=vmem, size = 0x2000, scoped, tag = 'input window, operand 1']
    #allocation9 [shape = 's32[2]{0}', space=sflag, size = 0x8, scoped, tag = 'scoped memory for tpu_custom_call.1']
    %9 = vsyncpa [#allocation7], 0
    %s10 = scalar_lea.sflag [#allocation7], 1
    %11 = vsyncpa %s10, 0
    %12 = vsyncpa [#allocation9], 0
    %s13 = scalar_lea.sflag [#allocation9], 1
    %14 = vsyncpa %s13, 0
    loop: start=0, step=1, limit=4
    $region2: #{tpu_custom_call.1} parent=1 // loop_pre_header
      _
    $region3: #{tpu_custom_call.1} parent=1 // loop_header
      %s16 = sphi 0, %s20
      %p17 = scmp.ge.s32.totalorder %s16, 4
      %s23 = sphi 0, %s35
      %s24 = sphi 0, %s31
      %s25 = sphi 0, %s23
      %s26 = sphi 0, %s24
      %s27 = sphi 0, %s25
      %s28 = sphi 0, %s26
      %s40 = sphi 0, %s42
      %s43 = sphi 0, %s40
      %s44 = sphi 0, %s43
      %s60 = sphi 0, %s44
      %s68 = sphi 0, %s70
      %s71 = sphi 0, %s68
      %s72 = sphi 0, %s71
      %s88 = sphi 0, %s72
      %s94 = sphi 0, %s96
      %s97 = sphi 0, %s94
      %s98 = sphi 0, %s97
      %s114 = sphi 0, %s98
      %s120 = sphi 0, %s122
      %s123 = sphi 0, %s120
      %s124 = sphi 0, %s123
      %s140 = sphi 0, %s124
    $region4: #{tpu_custom_call.1} parent=1 // loop_header_branch
      %19 = sbr.rel (%p17) target = $region8
    $region5: #{tpu_custom_call.1} parent=1 // loop_body
      %s21 = ssub.s32 %s16, 1
      %s22 = ssub.s32 %s16, 2
      %s29 = sadd.s32 1, %s24
      %p30 = scmp.ge.s32.totalorder %s29, 1
      %s31 = scalar_select %p30, 0, %s29
      %s32 = sadd.s32 1, %s23
      %s33 = scalar_select %p30, %s32, %s23
      %p34 = scmp.ge.s32.totalorder %s33, 2
      %s35 = scalar_select %p34, 0, %s33
      %s36 = ssub.s32 %s23, %s35
      %s37 = ssub.s32 %s24, %s31
      %s38 = sor.u32 %s36, %s37
      %p39 = scmp.eq.s32.totalorder %s38, 0
      %s41 = sadd.s32 %s40, 1
      %s42 = scalar_select %p39, %s40, %s41
      %p45 = pneg %p39
      %p46 = scmp.eq.s32.totalorder %s16, 1
      %p47 = por %p45, %p46
      %p48 = scmp.ne.s32.totalorder %s40, %s43
      %p49 = scmp.eq.s32.totalorder %s16, 0
      %p50 = por %p48, %p49
      %p51 = scmp.ne.s32.totalorder %s40, %s43
      %p52 = scmp.eq.s32.totalorder %s21, 1
      %p53 = por %p51, %p52
      %p54 = scmp.ne.s32.totalorder %s43, %s44
      %p55 = scmp.eq.s32.totalorder %s21, 0
      %p56 = por %p54, %p55
      %p57 = scmp.ne.s32.totalorder %s43, %s44
      %p58 = scmp.eq.s32.totalorder %s22, 1
      %p59 = por %p57, %p58
      %p61 = scmp.ne.s32.totalorder %s44, %s60
      %p62 = scmp.eq.s32.totalorder %s22, 0
      %p63 = por %p61, %p62
      %s64 = ssub.s32 %s23, %s35
      %s65 = ssub.s32 %s24, %s31
      %s66 = sor.u32 %s64, %s65
      %p67 = scmp.eq.s32.totalorder %s66, 0
      %s69 = sadd.s32 %s68, 1
      %s70 = scalar_select %p67, %s68, %s69
      %p73 = pneg %p67
      %p74 = scmp.eq.s32.totalorder %s16, 1
      %p75 = por %p73, %p74
      %p76 = scmp.ne.s32.totalorder %s68, %s71
      %p77 = scmp.eq.s32.totalorder %s16, 0
      %p78 = por %p76, %p77
      %p79 = scmp.ne.s32.totalorder %s68, %s71
      %p80 = scmp.eq.s32.totalorder %s21, 1
      %p81 = por %p79, %p80
      %p82 = scmp.ne.s32.totalorder %s71, %s72
      %p83 = scmp.eq.s32.totalorder %s21, 0
      %p84 = por %p82, %p83
      %p85 = scmp.ne.s32.totalorder %s71, %s72
      %p86 = scmp.eq.s32.totalorder %s22, 1
      %p87 = por %p85, %p86
      %p89 = scmp.ne.s32.totalorder %s72, %s88
      %p90 = scmp.eq.s32.totalorder %s22, 0
      %p91 = por %p89, %p90
      %s92 = ssub.s32 %s23, %s35
      %p93 = scmp.eq.s32.totalorder %s92, 0
      %s95 = sadd.s32 %s94, 1
      %s96 = scalar_select %p93, %s94, %s95
      %p99 = pneg %p93
      %p100 = scmp.eq.s32.totalorder %s16, 1
      %p101 = por %p99, %p100
      %p102 = scmp.ne.s32.totalorder %s94, %s97
      %p103 = scmp.eq.s32.totalorder %s16, 0
      %p104 = por %p102, %p103
      %p105 = scmp.ne.s32.totalorder %s94, %s97
      %p106 = scmp.eq.s32.totalorder %s21, 1
      %p107 = por %p105, %p106
      %p108 = scmp.ne.s32.totalorder %s97, %s98
      %p109 = scmp.eq.s32.totalorder %s21, 0
      %p110 = por %p108, %p109
      %p111 = scmp.ne.s32.totalorder %s97, %s98
      %p112 = scmp.eq.s32.totalorder %s22, 1
      %p113 = por %p111, %p112
      %p115 = scmp.ne.s32.totalorder %s98, %s114
      %p116 = scmp.eq.s32.totalorder %s22, 0
      %p117 = por %p115, %p116
      %s118 = ssub.s32 %s23, %s35
      %p119 = scmp.eq.s32.totalorder %s118, 0
      %s121 = sadd.s32 %s120, 1
      %s122 = scalar_select %p119, %s120, %s121
      %p125 = pneg %p119
      %p126 = scmp.eq.s32.totalorder %s16, 1
      %p127 = por %p125, %p126
      %p128 = scmp.ne.s32.totalorder %s120, %s123
      %p129 = scmp.eq.s32.totalorder %s16, 0
      %p130 = por %p128, %p129
      %p131 = scmp.ne.s32.totalorder %s120, %s123
      %p132 = scmp.eq.s32.totalorder %s21, 1
      %p133 = por %p131, %p132
      %p134 = scmp.ne.s32.totalorder %s123, %s124
      %p135 = scmp.eq.s32.totalorder %s21, 0
      %p136 = por %p134, %p135
      %p137 = scmp.ne.s32.totalorder %s123, %s124
      %p138 = scmp.eq.s32.totalorder %s22, 1
      %p139 = por %p137, %p138
      %p141 = scmp.ne.s32.totalorder %s124, %s140
      %p142 = scmp.eq.s32.totalorder %s22, 0
      %p143 = por %p141, %p142
      %p144 = scmp.le.s32.totalorder 1, %s16
      %p145 = scmp.lt.s32.totalorder %s16, 3
      %p146 = pnand %p144, %p145
      %p147 = pneg %p146
      // Predicated region
      $region9: #{tpu_custom_call.1} parent=5 // pred_check
        _
      $region10: #{tpu_custom_call.1} parent=5 // pred_check_branch
        %149 = sbr.rel (%p146) target = $region12
      $region11: #{tpu_custom_call.1} parent=5 // pred_region
        %s150 = ssub.s32 %s16, 1
      $region12: #{tpu_custom_call.1} parent=5 // pred_fallthru
        _
      %p151 = scmp.lt.s32.totalorder %s16, 2
      // Predicated region
      $region13: #{tpu_custom_call.1} parent=5 // pred_check
        %p152 = pneg %p151
      $region14: #{tpu_custom_call.1} parent=5 // pred_check_branch
        %154 = sbr.rel (%p152) target = $region16
      $region15: #{tpu_custom_call.1} parent=5 // pred_region
        // Predicated region
        $region17: #{tpu_custom_call.1} parent=15 // pred_check
          %p155 = pneg %p50
        $region18: #{tpu_custom_call.1} parent=15 // pred_check_branch
          %157 = sbr.rel (%p155) target = $region20
        $region19: #{tpu_custom_call.1} parent=15 // pred_region
          %s158 = sand.u32 %s40, 1
          %s159 = scalar_lea.sflag [#allocation7], %s158
          %s160 = sand.u32 %s40, 1
          %s161 = smul.addr %s160, 8
          %s162 = scalar_lea.vmem [#allocation6], %s161
          %s164 = ssub.s32 128, 128
          %165 = vsyncadd %s159, %s164
          %s166 = sadd.s32 %s24, %s23
          %s167 = smul.addr %s166, 128
          %s168 = scalar_lea.hbm %s0, %s167
          %s170 = sshll.u32 %s162, 4
          %s171 = int_to_ptr.vmem [resolvable:$true] %s170
          %173 = dma.hbm_to_vmem [thread:$0]  %s168, 128, %s171, %s159
        $region20: #{tpu_custom_call.1} parent=15 // pred_fallthru
          _
        // Predicated region
        $region21: #{tpu_custom_call.1} parent=15 // pred_check
          %p174 = pneg %p78
        $region22: #{tpu_custom_call.1} parent=15 // pred_check_branch
          %176 = sbr.rel (%p174) target = $region24
        $region23: #{tpu_custom_call.1} parent=15 // pred_region
          %s177 = sand.u32 %s68, 1
          %s178 = scalar_lea.sflag [#allocation9], %s177
          %s179 = sand.u32 %s68, 1
          %s180 = smul.addr %s179, 8
          %s181 = scalar_lea.vmem [#allocation8], %s180
          %s183 = ssub.s32 128, 128
          %184 = vsyncadd %s178, %s183
          %s185 = sadd.s32 %s24, %s23
          %s186 = smul.addr %s185, 128
          %s187 = scalar_lea.hbm %s1, %s186
          %s189 = sshll.u32 %s181, 4
          %s190 = int_to_ptr.vmem [resolvable:$true] %s189
          %192 = dma.hbm_to_vmem [thread:$0]  %s187, 128, %s190, %s178
        $region24: #{tpu_custom_call.1} parent=15 // pred_fallthru
          _
      $region16: #{tpu_custom_call.1} parent=5 // pred_fallthru
        _
      %p193 = scmp.le.s32.totalorder 1, %s16
      %p194 = scmp.lt.s32.totalorder %s16, 3
      %p195 = pnand %p193, %p194
      %p196 = pneg %p195
      // Predicated region
      $region25: #{tpu_custom_call.1} parent=5 // pred_check
        _
      $region26: #{tpu_custom_call.1} parent=5 // pred_check_branch
        %198 = sbr.rel (%p195) target = $region28
      $region27: #{tpu_custom_call.1} parent=5 // pred_region
        %s199 = ssub.s32 %s16, 1
        %s200 = sand.u32 %s43, 1
        %s201 = scalar_lea.sflag [#allocation7], %s200
        %s202 = sand.u32 %s43, 1
        %s203 = smul.addr %s202, 8
        %s204 = scalar_lea.vmem [#allocation6], %s203
        // Predicated region
        $region29: #{tpu_custom_call.1} parent=27 // pred_check
          %p205 = pneg %p56
        $region30: #{tpu_custom_call.1} parent=27 // pred_check_branch
          %207 = sbr.rel (%p205) target = $region32
        $region31: #{tpu_custom_call.1} parent=27 // pred_region
          %208 = dma.done %s201, 128
        $region32: #{tpu_custom_call.1} parent=27 // pred_fallthru
          _
        %s209 = sand.u32 %s71, 1
        %s210 = scalar_lea.sflag [#allocation9], %s209
        %s211 = sand.u32 %s71, 1
        %s212 = smul.addr %s211, 8
        %s213 = scalar_lea.vmem [#allocation8], %s212
        // Predicated region
        $region33: #{tpu_custom_call.1} parent=27 // pred_check
          %p214 = pneg %p84
        $region34: #{tpu_custom_call.1} parent=27 // pred_check_branch
          %216 = sbr.rel (%p214) target = $region36
        $region35: #{tpu_custom_call.1} parent=27 // pred_region
          %217 = dma.done %s210, 128
        $region36: #{tpu_custom_call.1} parent=27 // pred_fallthru
          _
        %s218 = sand.u32 %s43, 1
        %s219 = scalar_lea.sflag [#allocation7], %s218
        %s220 = sand.u32 %s43, 1
        %s221 = smul.addr %s220, 8
        %s222 = scalar_lea.vmem [#allocation6], %s221
        %p223 = pneg %p56
        %p224 = pneg %p53
        %s225 = sand.u32 %s71, 1
        %s226 = scalar_lea.sflag [#allocation9], %s225
        %s227 = sand.u32 %s71, 1
        %s228 = smul.addr %s227, 8
        %s229 = scalar_lea.vmem [#allocation8], %s228
        %p230 = pneg %p84
        %p231 = pneg %p81
        %p232 = pneg %p110
        %p233 = pneg %p107
        %p234 = scmp.lt.s32.totalorder %s25, 1
        %s235 = scalar_select %p234, %s25, 1
        %s236 = smul.addr %s235, 8
        %s237 = scalar_lea.vmem %s2, %s236
        %p238 = pneg %p136
        %p239 = pneg %p133
        %p240 = scmp.lt.s32.totalorder %s25, 1
        %s241 = scalar_select %p240, %s25, 1
        %s242 = smul.addr %s241, 8
        %s243 = scalar_lea.vmem %s3, %s242
        %p244 = scmp.lt.s32.totalorder %s25, 1
        %s245 = scalar_select %p244, %s25, 1
        %s246 = smul.addr %s245, 8
        %s247 = scalar_lea.vmem %s2, %s246
        %p248 = scmp.lt.s32.totalorder %s25, 1
        %s249 = scalar_select %p248, %s25, 1
        %s250 = smul.addr %s249, 8
        %s251 = scalar_lea.vmem %s3, %s250
        %p252 = scmp.eq.s32.totalorder %s26, 0
        // Predicated region
        $region37: #{tpu_custom_call.1} parent=27 // pred_check
          %p253 = pneg %p252
        $region38: #{tpu_custom_call.1} parent=27 // pred_check_branch
          %255 = sbr.rel (%p253) target = $region40
        $region39: #{tpu_custom_call.1} parent=27 // pred_region
          %vm256 = vcmask 7168
          %257 = vst.msk [vmem:[#allocation2] sm:$0xff] %vm256, -inf
          %258 = vst.msk [vmem:[#allocation3] sm:$0xff] %vm256, 0.0
          %259 = vst.msk [vmem:[#allocation4] sm:$0xff] %vm256, 0.0
          %260 = vst.msk [vmem:[#allocation5] sm:$0xff] %vm256, 0.0
        $region40: #{tpu_custom_call.1} parent=27 // pred_fallthru
          _
        %v261 = vld [vmem:[%s204] sm:$0xff]
        %v262 = vmul.f32 %v261, 1.25
        %v263 = vld [vmem:[%s213] sm:$0xff]
        %264 = vmax.xlane.f32.xlu0 %v262
        %v265 = vpop.xlane.xlu0 %264
        %v266 = vld [vmem:[#allocation2] sm:$0xff]
        %v267 = vmax.f32 %v266, %v265
        %v268 = vsub.f32 %v266, %v267
        %v269 = vmul.f32 %v268, 1.442695
        %v270 = vpow.pop %v269
        %v271 = vld [vmem:[#allocation3] sm:$0xff]
        %v272 = vmul.f32 %v270, %v271
        %274 = vset.pattern.permute.xlu0 0
        %275 = vperm.xlu0 %274, %v267
        %v276 = vpop.permute.xlu0 %275
        %v278 = vsub.f32 %v262, %v276
        %v279 = vmul.f32 %v278, 1.442695
        %v280 = vpow.pop %v279
        %281 = vadd.xlane.f32.xlu0 %v280
        %v282 = vpop.xlane.xlu0 %281
        %v283 = vadd.f32 %v272, %v282
        %vm284 = vcmask 7168
        %285 = vst.msk [vmem:[#allocation3] sm:$0xff] %vm284, %v283
        %v286 = vld [vmem:[#allocation4] sm:$0xff]
        %v287 = vmul.f32 %v263, %v262
        %288 = vadd.xlane.f32.xlu0 %v287
        %v289 = vpop.xlane.xlu0 %288
        %v290 = vadd.f32 %v286, %v289
        %291 = vst.msk [vmem:[#allocation4] sm:$0xff] %vm284, %v290
        %v292 = vld [vmem:[#allocation5] sm:$0xff]
        %293 = vadd.xlane.f32.xlu0 %v263
        %v294 = vpop.xlane.xlu0 %293
        %v295 = vadd.f32 %v292, %v294
        %296 = vst.msk [vmem:[#allocation5] sm:$0xff] %vm284, %v295
        %297 = vst.msk [vmem:[#allocation2] sm:$0xff] %vm284, %v267
        // Predicated region
        $region41: #{tpu_custom_call.1} parent=27 // pred_check
          %p298 = pneg %p252
        $region42: #{tpu_custom_call.1} parent=27 // pred_check_branch
          %300 = sbr.rel (%p298) target = $region44
        $region43: #{tpu_custom_call.1} parent=27 // pred_region
          %v301 = vld [vmem:[#allocation3] sm:$0xff]
          %v302 = vlog2.pop %v301
          %v303 = vmul.f32 %v302, 0.6931472
          %v304 = vld [vmem:[#allocation2] sm:$0xff]
          %v305 = vadd.f32 %v303, %v304
          %v306 = vld [vmem:[#allocation4] sm:$0xff]
          %v307 = vsub.f32 0.0, %v306
          %v308 = vld [vmem:[#allocation5] sm:$0xff]
          %v309 = vmul.f32 %v305, %v308
          %v310 = vadd.f32 %v307, %v309
          %v311 = vmul.f32 %v305, %v305
          %v312 = vmul.f32 %v311, 0.0001
          %v313 = vadd.f32 %v310, %v312
          %314 = vst.msk [vmem:[%s247] sm:$0xff] %vm284, %v313
          %315 = vst.msk [vmem:[%s251] sm:$0xff] %vm284, %v305
        $region44: #{tpu_custom_call.1} parent=27 // pred_fallthru
          _
        %p316 = scmp.lt.s32.totalorder %s25, 1
        %s317 = scalar_select %p316, %s25, 1
        %s318 = smul.addr %s317, 8
        %s319 = scalar_lea.vmem %s2, %s318
        %p320 = scmp.lt.s32.totalorder %s25, 1
        %s321 = scalar_select %p320, %s25, 1
        %s322 = smul.addr %s321, 8
        %s323 = scalar_lea.vmem %s3, %s322
        // Predicated region
        $region45: #{tpu_custom_call.1} parent=27 // pred_check
          %p324 = pneg %p107
        $region46: #{tpu_custom_call.1} parent=27 // pred_check_branch
          %326 = sbr.rel (%p324) target = $region48
        $region47: #{tpu_custom_call.1} parent=27 // pred_region
          _
        $region48: #{tpu_custom_call.1} parent=27 // pred_fallthru
          _
        // Predicated region
        $region49: #{tpu_custom_call.1} parent=27 // pred_check
          %p327 = pneg %p133
        $region50: #{tpu_custom_call.1} parent=27 // pred_check_branch
          %329 = sbr.rel (%p327) target = $region52
        $region51: #{tpu_custom_call.1} parent=27 // pred_region
          _
        $region52: #{tpu_custom_call.1} parent=27 // pred_fallthru
          _
      $region28: #{tpu_custom_call.1} parent=5 // pred_fallthru
        _
      %p330 = scmp.le.s32.totalorder 2, %s16
      // Predicated region
      $region53: #{tpu_custom_call.1} parent=5 // pred_check
        %p331 = pneg %p330
      $region54: #{tpu_custom_call.1} parent=5 // pred_check_branch
        %333 = sbr.rel (%p331) target = $region56
      $region55: #{tpu_custom_call.1} parent=5 // pred_region
        %s334 = ssub.s32 %s16, 2
        // Predicated region
        $region57: #{tpu_custom_call.1} parent=55 // pred_check
          %p335 = pneg %p113
        $region58: #{tpu_custom_call.1} parent=55 // pred_check_branch
          %337 = sbr.rel (%p335) target = $region60
        $region59: #{tpu_custom_call.1} parent=55 // pred_region
          %p338 = scmp.lt.s32.totalorder %s27, 1
          %s339 = scalar_select %p338, %s27, 1
          %s340 = smul.addr %s339, 8
          %s341 = scalar_lea.vmem %s2, %s340
        $region60: #{tpu_custom_call.1} parent=55 // pred_fallthru
          _
        // Predicated region
        $region61: #{tpu_custom_call.1} parent=55 // pred_check
          %p342 = pneg %p139
        $region62: #{tpu_custom_call.1} parent=55 // pred_check_branch
          %344 = sbr.rel (%p342) target = $region64
        $region63: #{tpu_custom_call.1} parent=55 // pred_region
          %p345 = scmp.lt.s32.totalorder %s27, 1
          %s346 = scalar_select %p345, %s27, 1
          %s347 = smul.addr %s346, 8
          %s348 = scalar_lea.vmem %s3, %s347
        $region64: #{tpu_custom_call.1} parent=55 // pred_fallthru
          _
      $region56: #{tpu_custom_call.1} parent=5 // pred_fallthru
        _
    $region6: #{tpu_custom_call.1} parent=1 // loop_footer
      %s20 = sadd.s32 1, %s16
    $region7: #{tpu_custom_call.1} parent=1 // loop_footer_branch
      %15 = sbr.rel target = $region3
    $region8: #{tpu_custom_call.1} parent=1 // loop_exit
      _
    %349 = vsyncpa [#allocation7], 1
    %s350 = scalar_lea.sflag [#allocation7], 1
    %351 = vsyncpa %s350, 1
    %352 = vsyncpa [#allocation9], 1
    %s353 = scalar_lea.sflag [#allocation9], 1
    %354 = vsyncpa %s353, 1

</llo_original>
